<compile_context>
chip_gen: v5e
topology: v5e:2x2
jax: 0.10.0
libtpu: 0.0.40
codegen_flags: <defaults>
</compile_context>

<pallas_src>
import functools

import jax
import jax.numpy as jnp
from jax.experimental import pallas as pl
from jax.experimental.pallas import tpu as pltpu


def _softplus(v):
    # Matches torch.nn.functional.softplus (beta=1, threshold=20); stable for
    # large v (no exp overflow).
    return jnp.where(v > 20.0, v, jnp.log1p(jnp.exp(jnp.minimum(v, 20.0))))


def _bayes_mlp_fused_kernel(
    x_ref,                                   # [B, D_in]
    w1_mu_ref, w1_rho_ref,                   # [D_in, R*H]  (rep-tiled on lane axis)
    b1_mu_ref, b1_rho_ref,                   # [1,   R*H]
    w2_mu_ref, w2_rho_ref,                   # [R*H, D_out] (rep-stacked on sublane axis)
    b2_mu_ref, b2_rho_ref,                   # [1, D_out]   (untiled)
    eps_w1_ref, eps_b1_ref,                  # [D_in, R*H], [1, R*H]
    eps_w2_ref, eps_b2_ref,                  # [R*H, D_out], [R, D_out]
    o_ref,                                   # [B, D_out]
):
    n_reps = eps_b2_ref.shape[0]             # static at trace time
    inv_reps = 1.0 / n_reps

    # Sample all reps' weights at once (softplus computed exactly once).
    w1_all = w1_mu_ref[...] + _softplus(w1_rho_ref[...]) * eps_w1_ref[...]   # [D_in, R*H]
    b1_all = b1_mu_ref[...] + _softplus(b1_rho_ref[...]) * eps_b1_ref[...]   # [1,   R*H]
    w2_all = w2_mu_ref[...] + _softplus(w2_rho_ref[...]) * eps_w2_ref[...]   # [R*H, D_out]

    # Layer 1 for every rep in one lane-dense MXU matmul.
    h_all = jnp.dot(x_ref[...], w1_all, preferred_element_type=jnp.float32) + b1_all
    h_all = jnp.maximum(h_all, 0.0)                                          # [B, R*H]

    # Layer 2: contracting over R*H sums the per-rep outputs for free.
    y = jnp.dot(h_all, w2_all, preferred_element_type=jnp.float32)           # [B, D_out]

    # Per-rep biases are purely additive — only their sum matters.
    b2_all = b2_mu_ref[...] + _softplus(b2_rho_ref[...]) * eps_b2_ref[...]   # [R, D_out]
    b2_sum = jnp.sum(b2_all, axis=0, keepdims=True)                          # [1, D_out]

    o_ref[...] = ((y + b2_sum) * inv_reps).astype(o_ref.dtype)


@functools.partial(jax.jit, static_argnames=("inference_reps",))
def simple_bayesian_forward(x, params, eps, *, inference_reps):
    """x: [B, D_in] f32.  params: dict of mu/rho arrays.  eps: dict of per-rep noise."""
    R = max(int(inference_reps), 1)
    B, D_in = x.shape
    H = params["w1_mu"].shape[1]
    D_out = params["w2_mu"].shape[1]

    # Layout-only plumbing: present the kernel with lane-dense fused operands.
    w1_mu_t  = jnp.tile(params["w1_mu"],  (1, R))                        # [D_in, R*H]
    w1_rho_t = jnp.tile(params["w1_rho"], (1, R))
    b1_mu_t  = jnp.tile(params["b1_mu"],  (1, R))                        # [1, R*H]
    b1_rho_t = jnp.tile(params["b1_rho"], (1, R))
    w2_mu_t  = jnp.tile(params["w2_mu"],  (R, 1))                        # [R*H, D_out]
    w2_rho_t = jnp.tile(params["w2_rho"], (R, 1))

    eps_w1 = jnp.transpose(eps["w1"], (1, 0, 2)).reshape(D_in, R * H)    # [D_in, R*H]
    eps_b1 = jnp.transpose(eps["b1"], (1, 0, 2)).reshape(1, R * H)       # [1, R*H]
    eps_w2 = eps["w2"].reshape(R * H, D_out)                             # [R*H, D_out]
    eps_b2 = eps["b2"].reshape(R, D_out)                                 # [R, D_out]

    vmem = lambda: pl.BlockSpec(memory_space=pltpu.MemorySpace.VMEM)

    # No grid: everything fits comfortably in VMEM on v5e/v6e/v7x, so a single
    # invocation avoids all per-step pipeline overhead.
    return pl.pallas_call(
        _bayes_mlp_fused_kernel,
        out_shape=jax.ShapeDtypeStruct((B, D_out), jnp.float32),
        in_specs=[vmem() for _ in range(13)],
        out_specs=vmem(),
    )(
        x,
        w1_mu_t, w1_rho_t, b1_mu_t, b1_rho_t,
        w2_mu_t, w2_rho_t,
        params["b2_mu"], params["b2_rho"],
        eps_w1, eps_b1, eps_w2, eps_b2,
    )


def _reference_forward(x, params, eps, inference_reps):
    """Pure-JAX reference (per-rep loop, same softplus) for correctness check."""
    outs = []
    for r in range(inference_reps):
        w1 = params["w1_mu"] + _softplus(params["w1_rho"]) * eps["w1"][r]
        b1 = params["b1_mu"] + _softplus(params["b1_rho"]) * eps["b1"][r]
        w2 = params["w2_mu"] + _softplus(params["w2_rho"]) * eps["w2"][r]
        b2 = params["b2_mu"] + _softplus(params["b2_rho"]) * eps["b2"][r]
        h = jnp.maximum(x @ w1 + b1, 0.0)
        outs.append(h @ w2 + b2)
    return jnp.mean(jnp.stack(outs), axis=0)


if __name__ == "__main__":
    # Small shapes consistent with simpleBayesian(input_dim, hid_dim, output_dim,
    # inference_reps, device).  R*H = 128 fills the lane axis exactly.
    B, D_in, H, D_out = 8, 16, 32, 8
    inference_reps = 4

    key = jax.random.PRNGKey(0)
    k = jax.random.split(key, 12)

    # Deterministic parameter init (Bayes-by-Backprop style: mu small, rho negative).
    params = {
        "w1_mu":  0.1 * jax.random.normal(k[0], (D_in, H), jnp.float32),
        "w1_rho": -3.0 + 0.1 * jax.random.normal(k[1], (D_in, H), jnp.float32),
        "b1_mu":  0.1 * jax.random.normal(k[2], (1, H), jnp.float32),
        "b1_rho": -3.0 + 0.1 * jax.random.normal(k[3], (1, H), jnp.float32),
        "w2_mu":  0.1 * jax.random.normal(k[4], (H, D_out), jnp.float32),
        "w2_rho": -3.0 + 0.1 * jax.random.normal(k[5], (H, D_out), jnp.float32),
        "b2_mu":  0.1 * jax.random.normal(k[6], (1, D_out), jnp.float32),
        "b2_rho": -3.0 + 0.1 * jax.random.normal(k[7], (1, D_out), jnp.float32),
    }

    # Per-rep reparameterization noise (sampled once here for determinism;
    # PyTorch draws fresh N(0,1) noise on every BLinear forward).
    eps = {
        "w1": jax.random.normal(k[8],  (inference_reps, D_in, H), jnp.float32),
        "b1": jax.random.normal(k[9],  (inference_reps, 1, H), jnp.float32),
        "w2": jax.random.normal(k[10], (inference_reps, H, D_out), jnp.float32),
        "b2": jax.random.normal(k[11], (inference_reps, 1, D_out), jnp.float32),
    }

    x = jax.random.normal(key, (B, D_in), jnp.float32)

    out = simple_bayesian_forward(x, params, eps, inference_reps=inference_reps)
    out = jax.block_until_ready(out)

    ref = _reference_forward(x, params, eps, inference_reps)
    assert out.shape == (B, D_out)
    assert jnp.allclose(out, ref, atol=1e-4, rtol=1e-5), "mismatch vs reference"

    print("KERNEL_OK")
</pallas_src>

<mosaic_0001>
module attributes {stable_mosaic.version = 11 : i64} {
  func.func @_bayes_mlp_fused_kernel(%arg0: memref<8x16xf32, #tpu.memory_space<vmem>>, %arg1: memref<16x128xf32, #tpu.memory_space<vmem>>, %arg2: memref<16x128xf32, #tpu.memory_space<vmem>>, %arg3: memref<1x128xf32, #tpu.memory_space<vmem>>, %arg4: memref<1x128xf32, #tpu.memory_space<vmem>>, %arg5: memref<128x8xf32, #tpu.memory_space<vmem>>, %arg6: memref<128x8xf32, #tpu.memory_space<vmem>>, %arg7: memref<1x8xf32, #tpu.memory_space<vmem>>, %arg8: memref<1x8xf32, #tpu.memory_space<vmem>>, %arg9: memref<16x128xf32, #tpu.memory_space<vmem>>, %arg10: memref<1x128xf32, #tpu.memory_space<vmem>>, %arg11: memref<128x8xf32, #tpu.memory_space<vmem>>, %arg12: memref<4x8xf32, #tpu.memory_space<vmem>>, %arg13: memref<8x8xf32, #tpu.memory_space<vmem>>) attributes {dimension_semantics = [], scalar_prefetch = 0 : i64, scratch_operands = 0 : i64, tpu.core_type = #tpu.core_type<tc>} {
    %c0 = arith.constant 0 : index
    %c0_0 = arith.constant 0 : index
    %0 = vector.load %arg1[%c0, %c0_0] : memref<16x128xf32, #tpu.memory_space<vmem>>, vector<16x128xf32>
    %c0_1 = arith.constant 0 : index
    %c0_2 = arith.constant 0 : index
    %1 = vector.load %arg2[%c0_1, %c0_2] : memref<16x128xf32, #tpu.memory_space<vmem>>, vector<16x128xf32>
    %cst = arith.constant 2.000000e+01 : f32
    %2 = vector.broadcast %cst : f32 to vector<16x128xf32>
    %3 = arith.cmpf ogt, %1, %2 : vector<16x128xf32>
    %cst_3 = arith.constant 2.000000e+01 : f32
    %4 = vector.broadcast %cst_3 : f32 to vector<16x128xf32>
    %5 = arith.minimumf %1, %4 : vector<16x128xf32>
    %6 = math.exp %5 : vector<16x128xf32>
    %7 = math.log1p %6 : vector<16x128xf32>
    %8 = arith.select %3, %1, %7 : vector<16x128xi1>, vector<16x128xf32>
    %c0_4 = arith.constant 0 : index
    %c0_5 = arith.constant 0 : index
    %9 = vector.load %arg9[%c0_4, %c0_5] : memref<16x128xf32, #tpu.memory_space<vmem>>, vector<16x128xf32>
    %10 = arith.mulf %8, %9 : vector<16x128xf32>
    %11 = arith.addf %0, %10 : vector<16x128xf32>
    %c0_6 = arith.constant 0 : index
    %c0_7 = arith.constant 0 : index
    %12 = vector.load %arg3[%c0_6, %c0_7] : memref<1x128xf32, #tpu.memory_space<vmem>>, vector<1x128xf32>
    %c0_8 = arith.constant 0 : index
    %c0_9 = arith.constant 0 : index
    %13 = vector.load %arg4[%c0_8, %c0_9] : memref<1x128xf32, #tpu.memory_space<vmem>>, vector<1x128xf32>
    %cst_10 = arith.constant 2.000000e+01 : f32
    %14 = vector.broadcast %cst_10 : f32 to vector<1x128xf32>
    %15 = arith.cmpf ogt, %13, %14 : vector<1x128xf32>
    %cst_11 = arith.constant 2.000000e+01 : f32
    %16 = vector.broadcast %cst_11 : f32 to vector<1x128xf32>
    %17 = arith.minimumf %13, %16 : vector<1x128xf32>
    %18 = math.exp %17 : vector<1x128xf32>
    %19 = math.log1p %18 : vector<1x128xf32>
    %20 = arith.select %15, %13, %19 : vector<1x128xi1>, vector<1x128xf32>
    %c0_12 = arith.constant 0 : index
    %c0_13 = arith.constant 0 : index
    %21 = vector.load %arg10[%c0_12, %c0_13] : memref<1x128xf32, #tpu.memory_space<vmem>>, vector<1x128xf32>
    %22 = arith.mulf %20, %21 : vector<1x128xf32>
    %23 = arith.addf %12, %22 : vector<1x128xf32>
    %c0_14 = arith.constant 0 : index
    %c0_15 = arith.constant 0 : index
    %24 = vector.load %arg5[%c0_14, %c0_15] : memref<128x8xf32, #tpu.memory_space<vmem>>, vector<128x8xf32>
    %c0_16 = arith.constant 0 : index
    %c0_17 = arith.constant 0 : index
    %25 = vector.load %arg6[%c0_16, %c0_17] : memref<128x8xf32, #tpu.memory_space<vmem>>, vector<128x8xf32>
    %cst_18 = arith.constant 2.000000e+01 : f32
    %26 = vector.broadcast %cst_18 : f32 to vector<128x8xf32>
    %27 = arith.cmpf ogt, %25, %26 : vector<128x8xf32>
    %cst_19 = arith.constant 2.000000e+01 : f32
    %28 = vector.broadcast %cst_19 : f32 to vector<128x8xf32>
    %29 = arith.minimumf %25, %28 : vector<128x8xf32>
    %30 = math.exp %29 : vector<128x8xf32>
    %31 = math.log1p %30 : vector<128x8xf32>
    %32 = arith.select %27, %25, %31 : vector<128x8xi1>, vector<128x8xf32>
    %c0_20 = arith.constant 0 : index
    %c0_21 = arith.constant 0 : index
    %33 = vector.load %arg11[%c0_20, %c0_21] : memref<128x8xf32, #tpu.memory_space<vmem>>, vector<128x8xf32>
    %34 = arith.mulf %32, %33 : vector<128x8xf32>
    %35 = arith.addf %24, %34 : vector<128x8xf32>
    %c0_22 = arith.constant 0 : index
    %c0_23 = arith.constant 0 : index
    %36 = vector.load %arg0[%c0_22, %c0_23] : memref<8x16xf32, #tpu.memory_space<vmem>>, vector<8x16xf32>
    %cst_24 = arith.constant dense<0.000000e+00> : vector<8x128xf32>
    %37 = tpu.matmul %36, %11, %cst_24 {dimension_numbers = #tpu.dot_dimension_numbers<[1], [0], [0], [1], [0, 0, 1, 1], [], []>} : vector<8x16xf32>, vector<16x128xf32>, vector<8x128xf32> -> vector<8x128xf32>
    %38 = vector.broadcast %23 : vector<1x128xf32> to vector<8x128xf32>
    %39 = arith.addf %37, %38 : vector<8x128xf32>
    %cst_25 = arith.constant 0.000000e+00 : f32
    %40 = vector.broadcast %cst_25 : f32 to vector<8x128xf32>
    %41 = arith.maximumf %39, %40 : vector<8x128xf32>
    %cst_26 = arith.constant dense<0.000000e+00> : vector<8x8xf32>
    %42 = tpu.matmul %41, %35, %cst_26 {dimension_numbers = #tpu.dot_dimension_numbers<[1], [0], [0], [1], [0, 0, 1, 1], [], []>} : vector<8x128xf32>, vector<128x8xf32>, vector<8x8xf32> -> vector<8x8xf32>
    %c0_27 = arith.constant 0 : index
    %c0_28 = arith.constant 0 : index
    %43 = vector.load %arg7[%c0_27, %c0_28] : memref<1x8xf32, #tpu.memory_space<vmem>>, vector<1x8xf32>
    %c0_29 = arith.constant 0 : index
    %c0_30 = arith.constant 0 : index
    %44 = vector.load %arg8[%c0_29, %c0_30] : memref<1x8xf32, #tpu.memory_space<vmem>>, vector<1x8xf32>
    %cst_31 = arith.constant 2.000000e+01 : f32
    %45 = vector.broadcast %cst_31 : f32 to vector<1x8xf32>
    %46 = arith.cmpf ogt, %44, %45 : vector<1x8xf32>
    %cst_32 = arith.constant 2.000000e+01 : f32
    %47 = vector.broadcast %cst_32 : f32 to vector<1x8xf32>
    %48 = arith.minimumf %44, %47 : vector<1x8xf32>
    %49 = math.exp %48 : vector<1x8xf32>
    %50 = math.log1p %49 : vector<1x8xf32>
    %51 = arith.select %46, %44, %50 : vector<1x8xi1>, vector<1x8xf32>
    %c0_33 = arith.constant 0 : index
    %c0_34 = arith.constant 0 : index
    %52 = vector.load %arg12[%c0_33, %c0_34] : memref<4x8xf32, #tpu.memory_space<vmem>>, vector<4x8xf32>
    %53 = vector.broadcast %51 : vector<1x8xf32> to vector<4x8xf32>
    %54 = arith.mulf %53, %52 : vector<4x8xf32>
    %55 = vector.broadcast %43 : vector<1x8xf32> to vector<4x8xf32>
    %56 = arith.addf %55, %54 : vector<4x8xf32>
    %cst_35 = arith.constant dense<0.000000e+00> : vector<8xf32>
    %57 = vector.multi_reduction <add>, %56, %cst_35 [0] : vector<4x8xf32> to vector<8xf32>
    %58 = vector.shape_cast %57 : vector<8xf32> to vector<1x8xf32>
    %59 = vector.broadcast %58 : vector<1x8xf32> to vector<8x8xf32>
    %60 = arith.addf %42, %59 : vector<8x8xf32>
    %cst_36 = arith.constant 2.500000e-01 : f32
    %61 = vector.broadcast %cst_36 : f32 to vector<8x8xf32>
    %62 = arith.mulf %60, %61 : vector<8x8xf32>
    %c0_37 = arith.constant 0 : index
    %c0_38 = arith.constant 0 : index
    %63 = vector.load %arg13[%c0_37, %c0_38] : memref<8x8xf32, #tpu.memory_space<vmem>>, vector<8x8xf32>
    tpu.vector_store %arg13[%c0_37, %c0_38], %62 {strides = array<i32>} : memref<8x8xf32, #tpu.memory_space<vmem>>, vector<8x8xf32>,
    return
  }
}

</mosaic_0001>

<llo_original>
// kernel: tile.34
$region0: #{tile.34}
  %s0 = inlined_call_operand.vmem [shape: f32[16,4,32], index: 0, kind: input, shape index: {}]
  %s1 = inlined_call_operand.vmem [shape: f32[16,128], index: 1, kind: output, shape index: {}]
  $region1: #{tile.34} parent=0
    #allocation0 [shape = 'u8[65536]{0}', space=vmem, size = 0x10000, scoped, tag = 'scoped mem for input reshape']
    %s3 = ssub.s32 16, 1
    %s4 = scalar_lea.vmem %s0, 60
    %v5 = vld [vmem:[%s4] sm:%s3]
    %s6 = scalar_lea.vmem [#allocation0], 120
    %7 = vst [vmem:[%s6] sm:%s3] %v5
    %s8 = scalar_lea.vmem %s0, 56
    %v9 = vld [vmem:[%s8] sm:%s3]
    %s10 = scalar_lea.vmem [#allocation0], 112
    %11 = vst [vmem:[%s10] sm:%s3] %v9
    %s12 = scalar_lea.vmem %s0, 52
    %v13 = vld [vmem:[%s12] sm:%s3]
    %s14 = scalar_lea.vmem [#allocation0], 104
    %15 = vst [vmem:[%s14] sm:%s3] %v13
    %s16 = scalar_lea.vmem %s0, 48
    %v17 = vld [vmem:[%s16] sm:%s3]
    %s18 = scalar_lea.vmem [#allocation0], 96
    %19 = vst [vmem:[%s18] sm:%s3] %v17
    %s20 = scalar_lea.vmem %s0, 44
    %v21 = vld [vmem:[%s20] sm:%s3]
    %s22 = scalar_lea.vmem [#allocation0], 88
    %23 = vst [vmem:[%s22] sm:%s3] %v21
    %s24 = scalar_lea.vmem %s0, 40
    %v25 = vld [vmem:[%s24] sm:%s3]
    %s26 = scalar_lea.vmem [#allocation0], 80
    %27 = vst [vmem:[%s26] sm:%s3] %v25
    %s28 = scalar_lea.vmem %s0, 36
    %v29 = vld [vmem:[%s28] sm:%s3]
    %s30 = scalar_lea.vmem [#allocation0], 72
    %31 = vst [vmem:[%s30] sm:%s3] %v29
    %s32 = scalar_lea.vmem %s0, 32
    %v33 = vld [vmem:[%s32] sm:%s3]
    %s34 = scalar_lea.vmem [#allocation0], 64
    %35 = vst [vmem:[%s34] sm:%s3] %v33
    %s36 = scalar_lea.vmem %s0, 28
    %v37 = vld [vmem:[%s36] sm:%s3]
    %s38 = scalar_lea.vmem [#allocation0], 56
    %39 = vst [vmem:[%s38] sm:%s3] %v37
    %s40 = scalar_lea.vmem %s0, 24
    %v41 = vld [vmem:[%s40] sm:%s3]
    %s42 = scalar_lea.vmem [#allocation0], 48
    %43 = vst [vmem:[%s42] sm:%s3] %v41
    %s44 = scalar_lea.vmem %s0, 20
    %v45 = vld [vmem:[%s44] sm:%s3]
    %s46 = scalar_lea.vmem [#allocation0], 40
    %47 = vst [vmem:[%s46] sm:%s3] %v45
    %s48 = scalar_lea.vmem %s0, 16
    %v49 = vld [vmem:[%s48] sm:%s3]
    %s50 = scalar_lea.vmem [#allocation0], 32
    %51 = vst [vmem:[%s50] sm:%s3] %v49
    %s52 = scalar_lea.vmem %s0, 12
    %v53 = vld [vmem:[%s52] sm:%s3]
    %s54 = scalar_lea.vmem [#allocation0], 24
    %55 = vst [vmem:[%s54] sm:%s3] %v53
    %s56 = scalar_lea.vmem %s0, 8
    %v57 = vld [vmem:[%s56] sm:%s3]
    %s58 = scalar_lea.vmem [#allocation0], 16
    %59 = vst [vmem:[%s58] sm:%s3] %v57
    %s60 = scalar_lea.vmem %s0, 4
    %v61 = vld [vmem:[%s60] sm:%s3]
    %s62 = scalar_lea.vmem [#allocation0], 8
    %63 = vst [vmem:[%s62] sm:%s3] %v61
    %v64 = vld [vmem:[%s0] sm:%s3]
    %65 = vst [vmem:[#allocation0] sm:%s3] %v64
    %v66 = vld [vmem:[#allocation0] ss:$8 sm:$0xf]
    %v67 = vld [vmem:[#allocation0] ss:$8 sm:$0xf0]
    %vm68 = vcmask 1047556
    %v69 = vsel %vm68, %v67, %v66
    %vm70 = vcmask 261120
    %71 = vst.msk [vmem:[%s1] sm:$0xff] %vm70, %v69
    %s72 = scalar_lea.vmem [#allocation0], 64
    %v73 = vld [vmem:[%s72] ss:$8 sm:$0xf]
    %s74 = scalar_lea.vmem [#allocation0], 64
    %v75 = vld [vmem:[%s74] ss:$8 sm:$0xf0]
    %vm76 = vcmask 1047556
    %v77 = vsel %vm76, %v75, %v73
    %vm78 = vcmask 261120
    %s79 = scalar_lea.vmem %s1, 8
    %80 = vst.msk [vmem:[%s79] sm:$0xff] %vm78, %v77
    %s81 = scalar_lea.vmem [#allocation0], 3
    %v82 = vld [vmem:[%s81] ss:$8 sm:$0xf]
    %s83 = scalar_lea.vmem [#allocation0], 3
    %v84 = vld [vmem:[%s83] ss:$8 sm:$0xf0]
    %vm85 = vcmask 1047556
    %v86 = vsel %vm85, %v84, %v82
    %87 = vrot.lane.b32.xlu0 %v86, 96
    %v88 = vpop.permute.xlu0 %87
    %vm89 = vcmask 1048320
    %90 = vst.msk [vmem:[%s1] sm:$0xff] %vm89, %v88
    %s91 = scalar_lea.vmem [#allocation0], 67
    %v92 = vld [vmem:[%s91] ss:$8 sm:$0xf]
    %s93 = scalar_lea.vmem [#allocation0], 67
    %v94 = vld [vmem:[%s93] ss:$8 sm:$0xf0]
    %vm95 = vcmask 1047556
    %v96 = vsel %vm95, %v94, %v92
    %97 = vrot.lane.b32.xlu0 %v96, 96
    %v98 = vpop.permute.xlu0 %97
    %vm99 = vcmask 1048320
    %s100 = scalar_lea.vmem %s1, 8
    %101 = vst.msk [vmem:[%s100] sm:$0xff] %vm99, %v98
    %s102 = scalar_lea.vmem [#allocation0], 2
    %v103 = vld [vmem:[%s102] ss:$8 sm:$0xf]
    %s104 = scalar_lea.vmem [#allocation0], 2
    %v105 = vld [vmem:[%s104] ss:$8 sm:$0xf0]
    %vm106 = vcmask 1047556
    %v107 = vsel %vm106, %v105, %v103
    %108 = vrot.lane.b32.xlu0 %v107, 64
    %v109 = vpop.permute.xlu0 %108
    %vm110 = vcmask 785920
    %111 = vst.msk [vmem:[%s1] sm:$0xff] %vm110, %v109
    %s112 = scalar_lea.vmem [#allocation0], 66
    %v113 = vld [vmem:[%s112] ss:$8 sm:$0xf]
    %s114 = scalar_lea.vmem [#allocation0], 66
    %v115 = vld [vmem:[%s114] ss:$8 sm:$0xf0]
    %vm116 = vcmask 1047556
    %v117 = vsel %vm116, %v115, %v113
    %118 = vrot.lane.b32.xlu0 %v117, 64
    %v119 = vpop.permute.xlu0 %118
    %vm120 = vcmask 785920
    %s121 = scalar_lea.vmem %s1, 8
    %122 = vst.msk [vmem:[%s121] sm:$0xff] %vm120, %v119
    %s123 = scalar_lea.vmem [#allocation0], 1
    %v124 = vld [vmem:[%s123] ss:$8 sm:$0xf]
    %s125 = scalar_lea.vmem [#allocation0], 1
    %v126 = vld [vmem:[%s125] ss:$8 sm:$0xf0]
    %vm127 = vcmask 1047556
    %v128 = vsel %vm127, %v126, %v124
    %129 = vrot.lane.b32.xlu0 %v128, 32
    %v130 = vpop.permute.xlu0 %129
    %vm131 = vcmask 523520
    %132 = vst.msk [vmem:[%s1] sm:$0xff] %vm131, %v130
    %s133 = scalar_lea.vmem [#allocation0], 65
    %v134 = vld [vmem:[%s133] ss:$8 sm:$0xf]
    %s135 = scalar_lea.vmem [#allocation0], 65
    %v136 = vld [vmem:[%s135] ss:$8 sm:$0xf0]
    %vm137 = vcmask 1047556
    %v138 = vsel %vm137, %v136, %v134
    %139 = vrot.lane.b32.xlu0 %v138, 32
    %v140 = vpop.permute.xlu0 %139
    %vm141 = vcmask 523520
    %s142 = scalar_lea.vmem %s1, 8
    %143 = vst.msk [vmem:[%s142] sm:$0xff] %vm141, %v140

// kernel: simple_bayesian_forward.1
$region0: #{simple_bayesian_forward.1}
  #allocation0 [shape = 'u32[]', space=smem, size = 0x4, offset = 0x4, fixed_abs, tag = 'smem constant byte address 0x4 - core index']
  #allocation1 [shape = 'u32[72,128]{1,0:T(1,128)}', space=vmem, size = 0x9000, scoped, tag = 'internal scratch']
  %s0 = inlined_call_operand.vmem [shape: f32[8,16], index: 0, kind: input, shape index: {}]
  %s1 = inlined_call_operand.vmem [shape: f32[16,128], index: 1, kind: input, shape index: {}]
  %s2 = inlined_call_operand.vmem [shape: f32[16,128], index: 2, kind: input, shape index: {}]
  %s3 = inlined_call_operand.vmem [shape: f32[1,128], index: 3, kind: input, shape index: {}]
  %s4 = inlined_call_operand.vmem [shape: f32[1,128], index: 4, kind: input, shape index: {}]
  %s5 = inlined_call_operand.vmem [shape: f32[128,8], index: 5, kind: input, shape index: {}]
  %s6 = inlined_call_operand.vmem [shape: f32[128,8], index: 6, kind: input, shape index: {}]
  %s7 = inlined_call_operand.vmem [shape: f32[1,8], index: 7, kind: input, shape index: {}]
  %s8 = inlined_call_operand.vmem [shape: f32[1,8], index: 8, kind: input, shape index: {}]
  %s9 = inlined_call_operand.vmem [shape: f32[16,128], index: 9, kind: input, shape index: {}]
  %s10 = inlined_call_operand.vmem [shape: f32[1,128], index: 10, kind: input, shape index: {}]
  %s11 = inlined_call_operand.vmem [shape: f32[128,8], index: 11, kind: input, shape index: {}]
  %s12 = inlined_call_operand.vmem [shape: f32[4,8], index: 12, kind: input, shape index: {}]
  %s13 = inlined_call_operand.hbm [shape: f32[8,8], index: 13, kind: output, shape index: {}]
  %s14 = sld [smem:[#allocation0]]
  $region62: #{simple_bayesian_forward.1} parent=0
    _
  %s16 = ssub.s32 1, %s14
  %s17 = scalar_select 0, %s16, %s14
  $region1: #{simple_bayesian_forward.1} parent=0
    #allocation2 [shape = 'u8[4096]{0}', space=vmem, size = 0x1000, scoped, tag = 'output window, operand 0, single buffered']
    #allocation3 [shape = 's32[1]{0}', space=sflag, size = 0x4, scoped, tag = 'scoped memory for simple_bayesian_forward.1']
    %18 = vsyncpa [#allocation3], 0
    // Predicated region
    $region2: #{simple_bayesian_forward.1} parent=1 // pred_check
      _
    $region3: #{simple_bayesian_forward.1} parent=1 // pred_check_branch
      %20 = sbr.rel (0) target = $region5
    $region4: #{simple_bayesian_forward.1} parent=1 // pred_region
      _
    $region5: #{simple_bayesian_forward.1} parent=1 // pred_fallthru
      _
    // Predicated region
    $region6: #{simple_bayesian_forward.1} parent=1 // pred_check
      _
    $region7: #{simple_bayesian_forward.1} parent=1 // pred_check_branch
      %22 = sbr.rel (0) target = $region9
    $region8: #{simple_bayesian_forward.1} parent=1 // pred_region
      _
    $region9: #{simple_bayesian_forward.1} parent=1 // pred_fallthru
      _
    // Predicated region
    $region10: #{simple_bayesian_forward.1} parent=1 // pred_check
      _
    $region11: #{simple_bayesian_forward.1} parent=1 // pred_check_branch
      %24 = sbr.rel (0) target = $region13
    $region12: #{simple_bayesian_forward.1} parent=1 // pred_region
      _
    $region13: #{simple_bayesian_forward.1} parent=1 // pred_fallthru
      _
    // Predicated region
    $region14: #{simple_bayesian_forward.1} parent=1 // pred_check
      _
    $region15: #{simple_bayesian_forward.1} parent=1 // pred_check_branch
      %26 = sbr.rel (0) target = $region17
    $region16: #{simple_bayesian_forward.1} parent=1 // pred_region
      _
    $region17: #{simple_bayesian_forward.1} parent=1 // pred_fallthru
      _
    // Predicated region
    $region18: #{simple_bayesian_forward.1} parent=1 // pred_check
      _
    $region19: #{simple_bayesian_forward.1} parent=1 // pred_check_branch
      %28 = sbr.rel (0) target = $region21
    $region20: #{simple_bayesian_forward.1} parent=1 // pred_region
      _
    $region21: #{simple_bayesian_forward.1} parent=1 // pred_fallthru
      _
    // Predicated region
    $region22: #{simple_bayesian_forward.1} parent=1 // pred_check
      _
    $region23: #{simple_bayesian_forward.1} parent=1 // pred_check_branch
      %30 = sbr.rel (0) target = $region25
    $region24: #{simple_bayesian_forward.1} parent=1 // pred_region
      _
    $region25: #{simple_bayesian_forward.1} parent=1 // pred_fallthru
      _
    // Predicated region
    $region26: #{simple_bayesian_forward.1} parent=1 // pred_check
      _
    $region27: #{simple_bayesian_forward.1} parent=1 // pred_check_branch
      %32 = sbr.rel (0) target = $region29
    $region28: #{simple_bayesian_forward.1} parent=1 // pred_region
      _
    $region29: #{simple_bayesian_forward.1} parent=1 // pred_fallthru
      _
    // Predicated region
    $region30: #{simple_bayesian_forward.1} parent=1 // pred_check
      _
    $region31: #{simple_bayesian_forward.1} parent=1 // pred_check_branch
      %34 = sbr.rel (0) target = $region33
    $region32: #{simple_bayesian_forward.1} parent=1 // pred_region
      _
    $region33: #{simple_bayesian_forward.1} parent=1 // pred_fallthru
      _
    // Predicated region
    $region34: #{simple_bayesian_forward.1} parent=1 // pred_check
      _
    $region35: #{simple_bayesian_forward.1} parent=1 // pred_check_branch
      %36 = sbr.rel (0) target = $region37
    $region36: #{simple_bayesian_forward.1} parent=1 // pred_region
      _
    $region37: #{simple_bayesian_forward.1} parent=1 // pred_fallthru
      _
    // Predicated region
    $region38: #{simple_bayesian_forward.1} parent=1 // pred_check
      _
    $region39: #{simple_bayesian_forward.1} parent=1 // pred_check_branch
      %38 = sbr.rel (0) target = $region41
    $region40: #{simple_bayesian_forward.1} parent=1 // pred_region
      _
    $region41: #{simple_bayesian_forward.1} parent=1 // pred_fallthru
      _
    // Predicated region
    $region42: #{simple_bayesian_forward.1} parent=1 // pred_check
      _
    $region43: #{simple_bayesian_forward.1} parent=1 // pred_check_branch
      %40 = sbr.rel (0) target = $region45
    $region44: #{simple_bayesian_forward.1} parent=1 // pred_region
      _
    $region45: #{simple_bayesian_forward.1} parent=1 // pred_fallthru
      _
    // Predicated region
    $region46: #{simple_bayesian_forward.1} parent=1 // pred_check
      _
    $region47: #{simple_bayesian_forward.1} parent=1 // pred_check_branch
      %42 = sbr.rel (0) target = $region49
    $region48: #{simple_bayesian_forward.1} parent=1 // pred_region
      _
    $region49: #{simple_bayesian_forward.1} parent=1 // pred_fallthru
      _
    // Predicated region
    $region50: #{simple_bayesian_forward.1} parent=1 // pred_check
      _
    $region51: #{simple_bayesian_forward.1} parent=1 // pred_check_branch
      %44 = sbr.rel (0) target = $region53
    $region52: #{simple_bayesian_forward.1} parent=1 // pred_region
      _
    $region53: #{simple_bayesian_forward.1} parent=1 // pred_fallthru
      _
    %v45 = vld [vmem:[%s1] sm:$0xff]
    %v46 = vld [vmem:[%s1 + $0x8] sm:$0xff]
    %v47 = vld [vmem:[%s2] sm:$0xff]
    %v48 = vld [vmem:[%s2 + $0x8] sm:$0xff]
    %vm49 = vcmp.gt.f32.partialorder %v47, 20.0
    %vm50 = vcmp.gt.f32.partialorder %v48, 20.0
    %v51 = vmin.f32 %v47, 20.0
    %v52 = vmin.f32 %v48, 20.0
    %v53 = vmul.f32 %v51, 1.442695
    %v54 = vpow.pop %v53
    %v55 = vmul.f32 %v52, 1.442695
    %v56 = vpow.pop %v55
    %v57 = vadd.f32 %v54, 1.0
    %v58 = vlog2.pop %v57
    %v59 = vmul.f32 %v58, 0.6931472
    %v60 = vmul.f32 -0.5, %v54
    %v61 = vadd.f32 %v60, 1.0
    %v62 = vmul.f32 %v61, %v54
    %v63 = vand.u32 2147483647, %v54
    %vm64 = vcmp.lt.f32.partialorder %v63, 0.0004427343
    %v65 = vsel %vm64, %v62, %v59
    %v66 = vadd.f32 %v56, 1.0
    %v67 = vlog2.pop %v66
    %v68 = vmul.f32 %v67, 0.6931472
    %v69 = vmul.f32 -0.5, %v56
    %v70 = vadd.f32 %v69, 1.0
    %v71 = vmul.f32 %v70, %v56
    %v72 = vand.u32 2147483647, %v56
    %vm73 = vcmp.lt.f32.partialorder %v72, 0.0004427343
    %v74 = vsel %vm73, %v71, %v68
    %v75 = vsel %vm49, %v47, %v65
    %v76 = vsel %vm50, %v48, %v74
    %v77 = vld [vmem:[%s9] sm:$0xff]
    %v78 = vld [vmem:[%s9 + $0x8] sm:$0xff]
    %v79 = vmul.f32 %v75, %v77
    %v80 = vmul.f32 %v76, %v78
    %v81 = vadd.f32 %v45, %v79
    %v82 = vadd.f32 %v46, %v80
    %v83 = vld [vmem:[%s3] sm:$0x1]
    %v84 = vld [vmem:[%s4] sm:$0x1]
    %vm85 = vcmp.gt.f32.partialorder %v84, 20.0
    %v86 = vmin.f32 %v84, 20.0
    %v87 = vmul.f32 %v86, 1.442695
    %v88 = vpow.pop %v87
    %v89 = vadd.f32 %v88, 1.0
    %v90 = vlog2.pop %v89
    %v91 = vmul.f32 %v90, 0.6931472
    %v92 = vmul.f32 -0.5, %v88
    %v93 = vadd.f32 %v92, 1.0
    %v94 = vmul.f32 %v93, %v88
    %v95 = vand.u32 2147483647, %v88
    %vm96 = vcmp.lt.f32.partialorder %v95, 0.0004427343
    %v97 = vsel %vm96, %v94, %v91
    %v98 = vsel %vm85, %v84, %v97
    %v99 = vld [vmem:[%s10] sm:$0x1]
    %v100 = vmul.f32 %v98, %v99
    %v101 = vadd.f32 %v83, %v100
    %v102 = vld [vmem:[%s5] sm:$0xff]
    %v103 = vld [vmem:[%s5 + $0x8] sm:$0xff]
    %v104 = vld [vmem:[%s5 + $0x10] sm:$0xff]
    %v105 = vld [vmem:[%s5 + $0x18] sm:$0xff]
    %v106 = vld [vmem:[%s5 + $0x20] sm:$0xff]
    %v107 = vld [vmem:[%s5 + $0x28] sm:$0xff]
    %v108 = vld [vmem:[%s5 + $0x30] sm:$0xff]
    %v109 = vld [vmem:[%s5 + $0x38] sm:$0xff]
    %v110 = vld [vmem:[%s5 + $0x40] sm:$0xff]
    %v111 = vld [vmem:[%s5 + $0x48] sm:$0xff]
    %v112 = vld [vmem:[%s5 + $0x50] sm:$0xff]
    %v113 = vld [vmem:[%s5 + $0x58] sm:$0xff]
    %v114 = vld [vmem:[%s5 + $0x60] sm:$0xff]
    %v115 = vld [vmem:[%s5 + $0x68] sm:$0xff]
    %v116 = vld [vmem:[%s5 + $0x70] sm:$0xff]
    %v117 = vld [vmem:[%s5 + $0x78] sm:$0xff]
    %v118 = vld [vmem:[%s6] sm:$0xff]
    %v119 = vld [vmem:[%s6 + $0x8] sm:$0xff]
    %v120 = vld [vmem:[%s6 + $0x10] sm:$0xff]
    %v121 = vld [vmem:[%s6 + $0x18] sm:$0xff]
    %v122 = vld [vmem:[%s6 + $0x20] sm:$0xff]
    %v123 = vld [vmem:[%s6 + $0x28] sm:$0xff]
    %v124 = vld [vmem:[%s6 + $0x30] sm:$0xff]
    %v125 = vld [vmem:[%s6 + $0x38] sm:$0xff]
    %v126 = vld [vmem:[%s6 + $0x40] sm:$0xff]
    %v127 = vld [vmem:[%s6 + $0x48] sm:$0xff]
    %v128 = vld [vmem:[%s6 + $0x50] sm:$0xff]
    %v129 = vld [vmem:[%s6 + $0x58] sm:$0xff]
    %v130 = vld [vmem:[%s6 + $0x60] sm:$0xff]
    %v131 = vld [vmem:[%s6 + $0x68] sm:$0xff]
    %v132 = vld [vmem:[%s6 + $0x70] sm:$0xff]
    %v133 = vld [vmem:[%s6 + $0x78] sm:$0xff]
    %vm134 = vcmp.gt.f32.partialorder %v118, 20.0
    %vm135 = vcmp.gt.f32.partialorder %v119, 20.0
    %vm136 = vcmp.gt.f32.partialorder %v120, 20.0
    %vm137 = vcmp.gt.f32.partialorder %v121, 20.0
    %vm138 = vcmp.gt.f32.partialorder %v122, 20.0
    %vm139 = vcmp.gt.f32.partialorder %v123, 20.0
    %vm140 = vcmp.gt.f32.partialorder %v124, 20.0
    %vm141 = vcmp.gt.f32.partialorder %v125, 20.0
    %vm142 = vcmp.gt.f32.partialorder %v126, 20.0
    %vm143 = vcmp.gt.f32.partialorder %v127, 20.0
    %vm144 = vcmp.gt.f32.partialorder %v128, 20.0
    %vm145 = vcmp.gt.f32.partialorder %v129, 20.0
    %vm146 = vcmp.gt.f32.partialorder %v130, 20.0
    %vm147 = vcmp.gt.f32.partialorder %v131, 20.0
    %vm148 = vcmp.gt.f32.partialorder %v132, 20.0
    %vm149 = vcmp.gt.f32.partialorder %v133, 20.0
    %v150 = vmin.f32 %v118, 20.0
    %v151 = vmin.f32 %v119, 20.0
    %v152 = vmin.f32 %v120, 20.0
    %v153 = vmin.f32 %v121, 20.0
    %v154 = vmin.f32 %v122, 20.0
    %v155 = vmin.f32 %v123, 20.0
    %v156 = vmin.f32 %v124, 20.0
    %v157 = vmin.f32 %v125, 20.0
    %v158 = vmin.f32 %v126, 20.0
    %v159 = vmin.f32 %v127, 20.0
    %v160 = vmin.f32 %v128, 20.0
    %v161 = vmin.f32 %v129, 20.0
    %v162 = vmin.f32 %v130, 20.0
    %v163 = vmin.f32 %v131, 20.0
    %v164 = vmin.f32 %v132, 20.0
    %v165 = vmin.f32 %v133, 20.0
    %v166 = vmul.f32 %v150, 1.442695
    %v167 = vpow.pop %v166
    %v168 = vmul.f32 %v151, 1.442695
    %v169 = vpow.pop %v168
    %v170 = vmul.f32 %v152, 1.442695
    %v171 = vpow.pop %v170
    %v172 = vmul.f32 %v153, 1.442695
    %v173 = vpow.pop %v172
    %v174 = vmul.f32 %v154, 1.442695
    %v175 = vpow.pop %v174
    %v176 = vmul.f32 %v155, 1.442695
    %v177 = vpow.pop %v176
    %v178 = vmul.f32 %v156, 1.442695
    %v179 = vpow.pop %v178
    %v180 = vmul.f32 %v157, 1.442695
    %v181 = vpow.pop %v180
    %v182 = vmul.f32 %v158, 1.442695
    %v183 = vpow.pop %v182
    %v184 = vmul.f32 %v159, 1.442695
    %v185 = vpow.pop %v184
    %v186 = vmul.f32 %v160, 1.442695
    %v187 = vpow.pop %v186
    %v188 = vmul.f32 %v161, 1.442695
    %v189 = vpow.pop %v188
    %v190 = vmul.f32 %v162, 1.442695
    %v191 = vpow.pop %v190
    %v192 = vmul.f32 %v163, 1.442695
    %v193 = vpow.pop %v192
    %v194 = vmul.f32 %v164, 1.442695
    %v195 = vpow.pop %v194
    %v196 = vmul.f32 %v165, 1.442695
    %v197 = vpow.pop %v196
    %v198 = vadd.f32 %v167, 1.0
    %v199 = vlog2.pop %v198
    %v200 = vmul.f32 %v199, 0.6931472
    %v201 = vmul.f32 -0.5, %v167
    %v202 = vadd.f32 %v201, 1.0
    %v203 = vmul.f32 %v202, %v167
    %v204 = vand.u32 2147483647, %v167
    %vm205 = vcmp.lt.f32.partialorder %v204, 0.0004427343
    %v206 = vsel %vm205, %v203, %v200
    %v207 = vadd.f32 %v169, 1.0
    %v208 = vlog2.pop %v207
    %v209 = vmul.f32 %v208, 0.6931472
    %v210 = vmul.f32 -0.5, %v169
    %v211 = vadd.f32 %v210, 1.0
    %v212 = vmul.f32 %v211, %v169
    %v213 = vand.u32 2147483647, %v169
    %vm214 = vcmp.lt.f32.partialorder %v213, 0.0004427343
    %v215 = vsel %vm214, %v212, %v209
    %v216 = vadd.f32 %v171, 1.0
    %v217 = vlog2.pop %v216
    %v218 = vmul.f32 %v217, 0.6931472
    %v219 = vmul.f32 -0.5, %v171
    %v220 = vadd.f32 %v219, 1.0
    %v221 = vmul.f32 %v220, %v171
    %v222 = vand.u32 2147483647, %v171
    %vm223 = vcmp.lt.f32.partialorder %v222, 0.0004427343
    %v224 = vsel %vm223, %v221, %v218
    %v225 = vadd.f32 %v173, 1.0
    %v226 = vlog2.pop %v225
    %v227 = vmul.f32 %v226, 0.6931472
    %v228 = vmul.f32 -0.5, %v173
    %v229 = vadd.f32 %v228, 1.0
    %v230 = vmul.f32 %v229, %v173
    %v231 = vand.u32 2147483647, %v173
    %vm232 = vcmp.lt.f32.partialorder %v231, 0.0004427343
    %v233 = vsel %vm232, %v230, %v227
    %v234 = vadd.f32 %v175, 1.0
    %v235 = vlog2.pop %v234
    %v236 = vmul.f32 %v235, 0.6931472
    %v237 = vmul.f32 -0.5, %v175
    %v238 = vadd.f32 %v237, 1.0
    %v239 = vmul.f32 %v238, %v175
    %v240 = vand.u32 2147483647, %v175
    %vm241 = vcmp.lt.f32.partialorder %v240, 0.0004427343
    %v242 = vsel %vm241, %v239, %v236
    %v243 = vadd.f32 %v177, 1.0
    %v244 = vlog2.pop %v243
    %v245 = vmul.f32 %v244, 0.6931472
    %v246 = vmul.f32 -0.5, %v177
    %v247 = vadd.f32 %v246, 1.0
    %v248 = vmul.f32 %v247, %v177
    %v249 = vand.u32 2147483647, %v177
    %vm250 = vcmp.lt.f32.partialorder %v249, 0.0004427343
    %v251 = vsel %vm250, %v248, %v245
    %v252 = vadd.f32 %v179, 1.0
    %v253 = vlog2.pop %v252
    %v254 = vmul.f32 %v253, 0.6931472
    %v255 = vmul.f32 -0.5, %v179
    %v256 = vadd.f32 %v255, 1.0
    %v257 = vmul.f32 %v256, %v179
    %v258 = vand.u32 2147483647, %v179
    %vm259 = vcmp.lt.f32.partialorder %v258, 0.0004427343
    %v260 = vsel %vm259, %v257, %v254
    %v261 = vadd.f32 %v181, 1.0
    %v262 = vlog2.pop %v261
    %v263 = vmul.f32 %v262, 0.6931472
    %v264 = vmul.f32 -0.5, %v181
    %v265 = vadd.f32 %v264, 1.0
    %v266 = vmul.f32 %v265, %v181
    %v267 = vand.u32 2147483647, %v181
    %vm268 = vcmp.lt.f32.partialorder %v267, 0.0004427343
    %v269 = vsel %vm268, %v266, %v263
    %v270 = vadd.f32 %v183, 1.0
    %v271 = vlog2.pop %v270
    %v272 = vmul.f32 %v271, 0.6931472
    %v273 = vmul.f32 -0.5, %v183
    %v274 = vadd.f32 %v273, 1.0
    %v275 = vmul.f32 %v274, %v183
    %v276 = vand.u32 2147483647, %v183
    %vm277 = vcmp.lt.f32.partialorder %v276, 0.0004427343
    %v278 = vsel %vm277, %v275, %v272
    %v279 = vadd.f32 %v185, 1.0
    %v280 = vlog2.pop %v279
    %v281 = vmul.f32 %v280, 0.6931472
    %v282 = vmul.f32 -0.5, %v185
    %v283 = vadd.f32 %v282, 1.0
    %v284 = vmul.f32 %v283, %v185
    %v285 = vand.u32 2147483647, %v185
    %vm286 = vcmp.lt.f32.partialorder %v285, 0.0004427343
    %v287 = vsel %vm286, %v284, %v281
    %v288 = vadd.f32 %v187, 1.0
    %v289 = vlog2.pop %v288
    %v290 = vmul.f32 %v289, 0.6931472
    %v291 = vmul.f32 -0.5, %v187
    %v292 = vadd.f32 %v291, 1.0
    %v293 = vmul.f32 %v292, %v187
    %v294 = vand.u32 2147483647, %v187
    %vm295 = vcmp.lt.f32.partialorder %v294, 0.0004427343
    %v296 = vsel %vm295, %v293, %v290
    %v297 = vadd.f32 %v189, 1.0
    %v298 = vlog2.pop %v297
    %v299 = vmul.f32 %v298, 0.6931472
    %v300 = vmul.f32 -0.5, %v189
    %v301 = vadd.f32 %v300, 1.0
    %v302 = vmul.f32 %v301, %v189
    %v303 = vand.u32 2147483647, %v189
    %vm304 = vcmp.lt.f32.partialorder %v303, 0.0004427343
    %v305 = vsel %vm304, %v302, %v299
    %v306 = vadd.f32 %v191, 1.0
    %v307 = vlog2.pop %v306
    %v308 = vmul.f32 %v307, 0.6931472
    %v309 = vmul.f32 -0.5, %v191
    %v310 = vadd.f32 %v309, 1.0
    %v311 = vmul.f32 %v310, %v191
    %v312 = vand.u32 2147483647, %v191
    %vm313 = vcmp.lt.f32.partialorder %v312, 0.0004427343
    %v314 = vsel %vm313, %v311, %v308
    %v315 = vadd.f32 %v193, 1.0
    %v316 = vlog2.pop %v315
    %v317 = vmul.f32 %v316, 0.6931472
    %v318 = vmul.f32 -0.5, %v193
    %v319 = vadd.f32 %v318, 1.0
    %v320 = vmul.f32 %v319, %v193
    %v321 = vand.u32 2147483647, %v193
    %vm322 = vcmp.lt.f32.partialorder %v321, 0.0004427343
    %v323 = vsel %vm322, %v320, %v317
    %v324 = vadd.f32 %v195, 1.0
    %v325 = vlog2.pop %v324
    %v326 = vmul.f32 %v325, 0.6931472
    %v327 = vmul.f32 -0.5, %v195
    %v328 = vadd.f32 %v327, 1.0
    %v329 = vmul.f32 %v328, %v195
    %v330 = vand.u32 2147483647, %v195
    %vm331 = vcmp.lt.f32.partialorder %v330, 0.0004427343
    %v332 = vsel %vm331, %v329, %v326
    %v333 = vadd.f32 %v197, 1.0
    %v334 = vlog2.pop %v333
    %v335 = vmul.f32 %v334, 0.6931472
    %v336 = vmul.f32 -0.5, %v197
    %v337 = vadd.f32 %v336, 1.0
    %v338 = vmul.f32 %v337, %v197
    %v339 = vand.u32 2147483647, %v197
    %vm340 = vcmp.lt.f32.partialorder %v339, 0.0004427343
    %v341 = vsel %vm340, %v338, %v335
    %v342 = vsel %vm134, %v118, %v206
    %v343 = vsel %vm135, %v119, %v215
    %v344 = vsel %vm136, %v120, %v224
    %v345 = vsel %vm137, %v121, %v233
    %v346 = vsel %vm138, %v122, %v242
    %v347 = vsel %vm139, %v123, %v251
    %v348 = vsel %vm140, %v124, %v260
    %v349 = vsel %vm141, %v125, %v269
    %v350 = vsel %vm142, %v126, %v278
    %v351 = vsel %vm143, %v127, %v287
    %v352 = vsel %vm144, %v128, %v296
    %v353 = vsel %vm145, %v129, %v305
    %v354 = vsel %vm146, %v130, %v314
    %v355 = vsel %vm147, %v131, %v323
    %v356 = vsel %vm148, %v132, %v332
    %v357 = vsel %vm149, %v133, %v341
    %v358 = vld [vmem:[%s11] sm:$0xff]
    %v359 = vld [vmem:[%s11 + $0x8] sm:$0xff]
    %v360 = vld [vmem:[%s11 + $0x10] sm:$0xff]
    %v361 = vld [vmem:[%s11 + $0x18] sm:$0xff]
    %v362 = vld [vmem:[%s11 + $0x20] sm:$0xff]
    %v363 = vld [vmem:[%s11 + $0x28] sm:$0xff]
    %v364 = vld [vmem:[%s11 + $0x30] sm:$0xff]
    %v365 = vld [vmem:[%s11 + $0x38] sm:$0xff]
    %v366 = vld [vmem:[%s11 + $0x40] sm:$0xff]
    %v367 = vld [vmem:[%s11 + $0x48] sm:$0xff]
    %v368 = vld [vmem:[%s11 + $0x50] sm:$0xff]
    %v369 = vld [vmem:[%s11 + $0x58] sm:$0xff]
    %v370 = vld [vmem:[%s11 + $0x60] sm:$0xff]
    %v371 = vld [vmem:[%s11 + $0x68] sm:$0xff]
    %v372 = vld [vmem:[%s11 + $0x70] sm:$0xff]
    %v373 = vld [vmem:[%s11 + $0x78] sm:$0xff]
    %v374 = vmul.f32 %v342, %v358
    %v375 = vmul.f32 %v343, %v359
    %v376 = vmul.f32 %v344, %v360
    %v377 = vmul.f32 %v345, %v361
    %v378 = vmul.f32 %v346, %v362
    %v379 = vmul.f32 %v347, %v363
    %v380 = vmul.f32 %v348, %v364
    %v381 = vmul.f32 %v349, %v365
    %v382 = vmul.f32 %v350, %v366
    %v383 = vmul.f32 %v351, %v367
    %v384 = vmul.f32 %v352, %v368
    %v385 = vmul.f32 %v353, %v369
    %v386 = vmul.f32 %v354, %v370
    %v387 = vmul.f32 %v355, %v371
    %v388 = vmul.f32 %v356, %v372
    %v389 = vmul.f32 %v357, %v373
    %v390 = vadd.f32 %v102, %v374
    %v391 = vadd.f32 %v103, %v375
    %v392 = vadd.f32 %v104, %v376
    %v393 = vadd.f32 %v105, %v377
    %v394 = vadd.f32 %v106, %v378
    %v395 = vadd.f32 %v107, %v379
    %v396 = vadd.f32 %v108, %v380
    %v397 = vadd.f32 %v109, %v381
    %v398 = vadd.f32 %v110, %v382
    %v399 = vadd.f32 %v111, %v383
    %v400 = vadd.f32 %v112, %v384
    %v401 = vadd.f32 %v113, %v385
    %v402 = vadd.f32 %v114, %v386
    %v403 = vadd.f32 %v115, %v387
    %v404 = vadd.f32 %v116, %v388
    %v405 = vadd.f32 %v117, %v389
    %v406 = vld [vmem:[%s0] sm:$0xff]
    %v408 = vperm.slane %v101, 0
    %vm410 = vcmask 130048
    %v412 = vsel %vm410, %v406, 0
    %414 = vmatpush.msra.mxu0 0.0
    %415 = vmatpush.msra.mxu0 0.0
    %416 = vmatpush.msra.mxu0 0.0
    %417 = vmatpush.msra.mxu0 0.0
    %418 = vmatpush.msra.mxu0 0.0
    %419 = vmatpush.msra.mxu0 0.0
    %420 = vmatpush.msra.mxu0 0.0
    %421 = vmatpush.msra.mxu0 0.0
    %422 = vmatpush.msra.mxu0 0.0
    %423 = vmatpush.msra.mxu0 0.0
    %424 = vmatpush.msra.mxu0 0.0
    %425 = vmatpush.msra.mxu0 0.0
    %426 = vmatpush.msra.mxu0 0.0
    %427 = vmatpush.msra.mxu0 0.0
    %428 = vmatpush.msra.mxu0 %v82
    %429 = vmatpush.msra.mxu0 %v81
    %430 = vmatmul.f32.gmra.mxu0 %v412
    %v431 = vpop.f32.mrf.mxu0
    %v432 = vadd.f32 %v408, %v431
    %433 = vdwg.mxu0
    %v434 = vmax.f32 %v432, 0.0
    %v435 = vld [vmem:[%s7] sm:$0x1]
    %v436 = vld [vmem:[%s8] sm:$0x1]
    %vm437 = vcmp.gt.f32.partialorder %v436, 20.0
    %v438 = vmin.f32 %v436, 20.0
    %v439 = vmul.f32 %v438, 1.442695
    %v440 = vpow.pop %v439
    %v441 = vadd.f32 %v440, 1.0
    %v442 = vlog2.pop %v441
    %v443 = vmul.f32 %v442, 0.6931472
    %v444 = vmul.f32 -0.5, %v440
    %v445 = vadd.f32 %v444, 1.0
    %v446 = vmul.f32 %v445, %v440
    %v447 = vand.u32 2147483647, %v440
    %vm448 = vcmp.lt.f32.partialorder %v447, 0.0004427343
    %v449 = vsel %vm448, %v446, %v443
    %v450 = vsel %vm437, %v436, %v449
    %v451 = vld [vmem:[%s12] sm:$0xf]
    %v453 = vperm.slane %v450, 0
    %v455 = vmul.f32 %v453, %v451
    %v457 = vperm.slane %v435, 0
    %v459 = vadd.f32 %v457, %v455
    %vm460 = vcmask 60416
    %v461 = vsel %vm460, %v459, 0.0
    %v462 = vrot.slane %v461, 4
    %v463 = vadd.f32 %v461, %v462
    %v464 = vrot.slane %v463, 2
    %v465 = vadd.f32 %v463, %v464
    %v466 = vrot.slane %v465, 1
    %v467 = vadd.f32 %v465, %v466
    %468 = vmatpush.msra.mxu0 %v405
    %469 = vmatpush.msra.mxu0 %v404
    %470 = vmatpush.msra.mxu0 %v403
    %471 = vmatpush.msra.mxu0 %v402
    %472 = vmatpush.msra.mxu0 %v401
    %473 = vmatpush.msra.mxu0 %v400
    %474 = vmatpush.msra.mxu0 %v399
    %475 = vmatpush.msra.mxu0 %v398
    %476 = vmatpush.msra.mxu0 %v397
    %477 = vmatpush.msra.mxu0 %v396
    %478 = vmatpush.msra.mxu0 %v395
    %479 = vmatpush.msra.mxu0 %v394
    %480 = vmatpush.msra.mxu0 %v393
    %481 = vmatpush.msra.mxu0 %v392
    %482 = vmatpush.msra.mxu0 %v391
    %483 = vmatpush.msra.mxu0 %v390
    %484 = vmatmul.f32.gmra.mxu0 %v434
    %v485 = vpop.f32.mrf.mxu0
    %v486 = vadd.f32 %v467, %v485
    %487 = vdwg.mxu0
    %v488 = vmul.f32 %v486, 0.25
    %vm489 = vcmask 64512
    %490 = vst.msk [vmem:[#allocation2] sm:$0xff] %vm489, %v488
    // Predicated region
    $region54: #{simple_bayesian_forward.1} parent=1 // pred_check
      _
    $region55: #{simple_bayesian_forward.1} parent=1 // pred_check_branch
      %492 = sbr.rel (0) target = $region57
    $region56: #{simple_bayesian_forward.1} parent=1 // pred_region
      %494 = vsyncadd [#allocation3], 0
      %s496 = sshll.u32 [#allocation2], 4
      %s497 = int_to_ptr.vmem [resolvable:$true] %s496
      %s498 = sshll.u32 %s13, 4
      %s499 = int_to_ptr.hbm [resolvable:$true] %s498
      %501 = dma.vmem_to_hbm [thread:$0]  %s497, 128, %s499, [#allocation3]
    $region57: #{simple_bayesian_forward.1} parent=1 // pred_fallthru
      _
    // Predicated region
    $region58: #{simple_bayesian_forward.1} parent=1 // pred_check
      _
    $region59: #{simple_bayesian_forward.1} parent=1 // pred_check_branch
      %503 = sbr.rel (0) target = $region61
    $region60: #{simple_bayesian_forward.1} parent=1 // pred_region
      %505 = dma.done [#allocation3], 128
    $region61: #{simple_bayesian_forward.1} parent=1 // pred_fallthru
      _
    %506 = vsyncpa [#allocation3], 1

</llo_original>
